<compile_context>
chip_gen: v7x
topology: tpu7x:2x2x1
jax: 0.10.0
libtpu: 0.0.40
codegen_flags: <defaults>
</compile_context>

<pallas_src>
import functools

import jax
import jax.numpy as jnp
import numpy as np
from jax import lax
from jax.experimental import pallas as pl
from jax.experimental.pallas import tpu as pltpu

LRELU_SLOPE = 0.2
IN_EPS = 1e-5
LANE = 128
TILE_M = 128


def _round_up(x, m):
    return (x + m - 1) // m * m


# -----------------------------------------------------------------------------
# Kernel 1: K-packed conv GEMM (+ bias, + optional fused LeakyReLU)
# -----------------------------------------------------------------------------
def _conv_gemm_kernel(x_ref, w_ref, b_ref, o_ref, *, negative_slope):
    # x_ref: (TILE_M, Kp) bf16 im2col patches tile
    # w_ref: (Kp, Cp)     bf16 packed conv weight
    # b_ref: (1, Cp)      f32  bias (zeros when the conv has no bias)
    # o_ref: (TILE_M, Cp) f32
    acc = jnp.dot(x_ref[...], w_ref[...], preferred_element_type=jnp.float32)
    acc = acc + b_ref[...]
    if negative_slope is not None:
        acc = jnp.where(acc >= 0.0, acc, negative_slope * acc)
    o_ref[...] = acc


def _im2col(x_nhwc, kh, kw, stride, pad):
    """(N,H,W,C) -> (N*OH*OW, kh*kw*C); K index order = (kh, kw, cin)."""
    n, h, w, c = x_nhwc.shape
    oh = (h + 2 * pad - kh) // stride + 1
    ow = (w + 2 * pad - kw) // stride + 1
    xp = jnp.pad(x_nhwc, ((0, 0), (pad, pad), (pad, pad), (0, 0)))
    cols = []
    for i in range(kh):
        for j in range(kw):
            cols.append(xp[:, i:i + stride * (oh - 1) + 1:stride,
                           j:j + stride * (ow - 1) + 1:stride, :])
    patches = jnp.concatenate(cols, axis=-1)            # (N, OH, OW, kh*kw*C)
    return patches.reshape(n * oh * ow, kh * kw * c), (n, oh, ow)


def conv2d_pallas(x_nhwc, layer):
    """Conv2d (+bias, + optional fused LeakyReLU) as one gridded Pallas GEMM."""
    patches, (n, oh, ow) = _im2col(x_nhwc, layer["kh"], layer["kw"],
                                   layer["stride"], layer["pad"])
    m, k = patches.shape
    kp, cp = layer["w_packed"].shape
    cout = layer["cout"]
    mp = _round_up(m, TILE_M)

    xb = jnp.zeros((mp, kp), jnp.bfloat16)
    xb = xb.at[:m, :k].set(patches.astype(jnp.bfloat16))

    # scoped-VMEM budget: double-buffered input/weight/bias/output tiles + slack.
    est = 2 * (TILE_M * kp * 2 + kp * cp * 2 + cp * 4 + TILE_M * cp * 4)
    vmem_limit = int(min(max(4 * est, 32 * 1024 * 1024), 64 * 1024 * 1024))

    out = pl.pallas_call(
        functools.partial(_conv_gemm_kernel, negative_slope=layer["fused_act"]),
        out_shape=jax.ShapeDtypeStruct((mp, cp), jnp.float32),
        grid_spec=pltpu.PrefetchScalarGridSpec(
            num_scalar_prefetch=0,
            grid=(mp // TILE_M,),
            in_specs=[
                pl.BlockSpec((TILE_M, kp), lambda i: (i, 0)),
                pl.BlockSpec((kp, cp), lambda i: (0, 0)),
                pl.BlockSpec((1, cp), lambda i: (0, 0)),
            ],
            out_specs=pl.BlockSpec((TILE_M, cp), lambda i: (i, 0)),
        ),
        compiler_params=pltpu.CompilerParams(
            dimension_semantics=("parallel",),
            vmem_limit_bytes=vmem_limit),
    )(xb, layer["w_packed"], layer["b_packed"])

    return out[:m, :cout].reshape(n, oh, ow, cout)


# -----------------------------------------------------------------------------
# Kernel 2: InstanceNorm2d (affine=False) + LeakyReLU, one grid program / sample
# -----------------------------------------------------------------------------
def _instnorm_lrelu_kernel(y_ref, o_ref, *, inv_hw, eps, negative_slope):
    y = y_ref[...]                                       # (1, HW, Cp) f32
    s1 = jnp.sum(y, axis=1, keepdims=True)               # single-pass stats:
    s2 = jnp.sum(y * y, axis=1, keepdims=True)           # sum and sum-of-squares
    mean = s1 * inv_hw
    var = jnp.maximum(s2 * inv_hw - mean * mean, 0.0)
    yn = (y - mean) * lax.rsqrt(var + eps)
    o_ref[...] = jnp.where(yn >= 0.0, yn, negative_slope * yn)


def instance_norm_lrelu_pallas(y_nhwc):
    n, oh, ow, c = y_nhwc.shape
    hw = oh * ow
    cp = _round_up(c, LANE)
    yp = jnp.zeros((n, hw, cp), jnp.float32)
    yp = yp.at[:, :, :c].set(y_nhwc.reshape(n, hw, c))
    out = pl.pallas_call(
        functools.partial(_instnorm_lrelu_kernel, inv_hw=1.0 / hw,
                          eps=IN_EPS, negative_slope=LRELU_SLOPE),
        out_shape=jax.ShapeDtypeStruct((n, hw, cp), jnp.float32),
        grid_spec=pltpu.PrefetchScalarGridSpec(
            num_scalar_prefetch=0,
            grid=(n,),
            in_specs=[pl.BlockSpec((1, hw, cp), lambda i: (i, 0, 0))],
            out_specs=pl.BlockSpec((1, hw, cp), lambda i: (i, 0, 0)),
        ),
        compiler_params=pltpu.CompilerParams(
            dimension_semantics=("parallel",)),
    )(yp)
    return out[:, :, :c].reshape(n, oh, ow, c)


# -----------------------------------------------------------------------------
# Kernel 3: avg_pool2d(k=3, s=2, p=1, count_include_pad=False) on a lane-dense slab
# -----------------------------------------------------------------------------
def _avgpool_kernel(taps_ref, inv_ref, o_ref):
    # taps_ref: (9, R, 128)  f32, inv_ref/o_ref: (R, 128) f32
    acc = taps_ref[0]
    for t in range(1, 9):
        acc = acc + taps_ref[t]
    o_ref[...] = acc * inv_ref[...]


def avg_pool_3x3_s2_pallas(x_nhwc):
    n, h, w, c = x_nhwc.shape
    oh = (h + 2 - 3) // 2 + 1
    ow = (w + 2 - 3) // 2 + 1
    xp = jnp.pad(x_nhwc, ((0, 0), (1, 1), (1, 1), (0, 0)))
    taps = [xp[:, i:i + 2 * (oh - 1) + 1:2, j:j + 2 * (ow - 1) + 1:2, :]
            for i in range(3) for j in range(3)]          # 9 x (N, OH, OW, C)

    # count_include_pad=False divisor
    rs = jnp.arange(oh) * 2 - 1
    cs = jnp.arange(ow) * 2 - 1
    rcnt = jnp.minimum(rs + 3, h) - jnp.maximum(rs, 0)
    ccnt = jnp.minimum(cs + 3, w) - jnp.maximum(cs, 0)
    inv = 1.0 / (rcnt[:, None] * ccnt[None, :]).astype(jnp.float32)
    inv = jnp.broadcast_to(inv[None, :, :, None], (n, oh, ow, c))

    total = n * oh * ow * c
    rtot = _round_up(total, 8 * LANE)

    def lane_pack(a):                                     # flatten to lane-dense (R, 128)
        return jnp.pad(a.reshape(-1), (0, rtot - total)).reshape(rtot // LANE, LANE)

    taps_flat = jnp.stack([lane_pack(t) for t in taps], axis=0)
    inv_flat = lane_pack(inv)

    out = pl.pallas_call(
        _avgpool_kernel,
        out_shape=jax.ShapeDtypeStruct((rtot // LANE, LANE), jnp.float32),
        in_specs=[pl.BlockSpec(memory_space=pltpu.MemorySpace.VMEM),
                  pl.BlockSpec(memory_space=pltpu.MemorySpace.VMEM)],
        out_specs=pl.BlockSpec(memory_space=pltpu.MemorySpace.VMEM),
    )(taps_flat, inv_flat)

    return out.reshape(-1)[:total].reshape(n, oh, ow, c)


# -----------------------------------------------------------------------------
# Parameter construction / one-time packing (plain JAX, outside the hot path)
# -----------------------------------------------------------------------------
def _l2normalize(v, eps=1e-12):
    return v / jnp.maximum(jnp.linalg.norm(v), eps)


def spectral_normalize(w_oihw, u, n_power_iterations=1, eps=1e-12):
    """torch.nn.utils.spectral_norm forward weight (one power iteration on u)."""
    cout = w_oihw.shape[0]
    w_mat = w_oihw.reshape(cout, -1)
    v = None
    for _ in range(n_power_iterations):
        v = _l2normalize(w_mat.T @ u, eps)
        u = _l2normalize(w_mat @ v, eps)
    sigma = jnp.dot(u, w_mat @ v)
    return w_oihw / sigma


def make_nlayer_params(key, input_nc, ndf, n_layers_d):
    """Raw PyTorch-layout (OIHW) parameters of one NLayerDiscriminator."""
    kw, pw = 4, 2                                        # pw = ceil((kw-1)/2)
    layers = []
    nf = ndf
    k0, k1, key = jax.random.split(key, 3)
    layers.append(dict(w=0.1 * jax.random.normal(k0, (nf, input_nc, kw, kw), jnp.float32),
                       b=0.05 * jax.random.normal(k1, (nf,), jnp.float32),
                       u=None, stride=2, pad=pw,
                       instance_norm=False, fused_act=LRELU_SLOPE))
    for _ in range(1, n_layers_d):
        nf_prev, nf = nf, min(nf * 2, 512)
        k0, k1, key = jax.random.split(key, 3)
        layers.append(dict(w=0.1 * jax.random.normal(k0, (nf, nf_prev, kw, kw), jnp.float32),
                           b=None,                       # bias removed by norm_layer
                           u=_l2normalize(jax.random.normal(k1, (nf,), jnp.float32)),
                           stride=2, pad=pw,
                           instance_norm=True, fused_act=None))
    k0, k1, key = jax.random.split(key, 3)
    layers.append(dict(w=0.1 * jax.random.normal(k0, (1, nf, kw, kw), jnp.float32),
                       b=0.05 * jax.random.normal(k1, (1,), jnp.float32),
                       u=None, stride=1, pad=pw,
                       instance_norm=False, fused_act=None))
    return layers


def pack_layer(layer):
    """One-time weight prep: spectral norm, OIHW->(K,Cout), pad to lanes, bf16."""
    w = layer["w"]
    if layer["u"] is not None:
        w = spectral_normalize(w, layer["u"])
    cout, cin, kh, kw = w.shape
    k = kh * kw * cin
    w_kc = jnp.transpose(w, (2, 3, 1, 0)).reshape(k, cout)
    kp, cp = _round_up(k, LANE), _round_up(cout, LANE)
    w_packed = jnp.zeros((kp, cp), jnp.bfloat16)
    w_packed = w_packed.at[:k, :cout].set(w_kc.astype(jnp.bfloat16))
    b = layer["b"] if layer["b"] is not None else jnp.zeros((cout,), jnp.float32)
    b_packed = jnp.zeros((1, cp), jnp.float32).at[0, :cout].set(b.astype(jnp.float32))
    return dict(w_packed=w_packed, b_packed=b_packed, cout=cout, kh=kh, kw=kw,
                stride=layer["stride"], pad=layer["pad"],
                instance_norm=layer["instance_norm"], fused_act=layer["fused_act"])


# -----------------------------------------------------------------------------
# Forward passes
# -----------------------------------------------------------------------------
def nlayer_forward_pallas(x_nhwc, packed_layers):
    feats, h = [], x_nhwc
    for lyr in packed_layers:
        h = conv2d_pallas(h, lyr)
        if lyr["instance_norm"]:
            h = instance_norm_lrelu_pallas(h)
        feats.append(h)
    return feats


def multiscale_forward_pallas(x_nchw, packed_all):
    """MultiscaleDiscriminator.forward: list (per scale) of lists of features (NCHW)."""
    x = jnp.transpose(x_nchw, (0, 2, 3, 1)).astype(jnp.float32)   # NCHW->NHWC once
    results = []
    for d, packed_layers in enumerate(packed_all):
        feats = nlayer_forward_pallas(x, packed_layers)
        results.append([jnp.transpose(f, (0, 3, 1, 2)) for f in feats])
        if d + 1 < len(packed_all):
            # PyTorch also downsamples after the last D but never uses the result;
            # skipping it leaves the forward outputs identical.
            x = avg_pool_3x3_s2_pallas(x)
    return results


def multiscale_forward_reference(x_nchw, raw_all):
    """Pure-JAX f32 reference of the PyTorch forward (validation only)."""
    dn = ("NCHW", "OIHW", "NCHW")
    prec = lax.Precision.HIGHEST
    x = x_nchw.astype(jnp.float32)
    results = []
    for d, layers in enumerate(raw_all):
        feats, h = [], x
        for lyr in layers:
            w = lyr["w"]
            if lyr["u"] is not None:
                w = spectral_normalize(w, lyr["u"])
            h = lax.conv_general_dilated(
                h, w, (lyr["stride"],) * 2, [(lyr["pad"],) * 2] * 2,
                dimension_numbers=dn, precision=prec)
            if lyr["b"] is not None:
                h = h + lyr["b"].reshape(1, -1, 1, 1)
            if lyr["instance_norm"]:
                mean = jnp.mean(h, axis=(2, 3), keepdims=True)
                var = jnp.mean((h - mean) ** 2, axis=(2, 3), keepdims=True)
                h = (h - mean) * lax.rsqrt(var + IN_EPS)
                h = jnp.where(h >= 0.0, h, LRELU_SLOPE * h)
            elif lyr["fused_act"] is not None:
                h = jnp.where(h >= 0.0, h, LRELU_SLOPE * h)
            feats.append(h)
        results.append(feats)
        if d + 1 < len(raw_all):
            s = lax.reduce_window(x, 0.0, lax.add, (1, 1, 3, 3), (1, 1, 2, 2),
                                  [(0, 0), (0, 0), (1, 1), (1, 1)])
            cnt = lax.reduce_window(jnp.ones_like(x), 0.0, lax.add,
                                    (1, 1, 3, 3), (1, 1, 2, 2),
                                    [(0, 0), (0, 0), (1, 1), (1, 1)])
            x = s / cnt
    return results


if __name__ == "__main__":
    key = jax.random.PRNGKey(0)
    kx, kd0, kd1 = jax.random.split(key, 3)

    # opt: num_D=2, n_layers_D=2, ndf=8, gen_semantic_nc=1 (input_nc=4),
    #      norm_D='spectralinstance', no_ganFeat_loss=False
    num_d, n_layers_d, ndf, input_nc = 2, 2, 8, 4
    n, hgt, wid = 2, 16, 16

    x = jax.random.normal(kx, (n, input_nc, hgt, wid), jnp.float32)
    raw_all = [make_nlayer_params(kd0, input_nc, ndf, n_layers_d),
               make_nlayer_params(kd1, input_nc, ndf, n_layers_d)]
    packed_all = [[pack_layer(l) for l in layers] for layers in raw_all]

    outs = jax.block_until_ready(multiscale_forward_pallas(x, packed_all))
    refs = jax.block_until_ready(multiscale_forward_reference(x, raw_all))

    # bf16 MXU operands (f32 accumulation) -> loosened tolerance vs f32 reference.
    for d_out, d_ref in zip(outs, refs):
        for o, r in zip(d_out, d_ref):
            assert o.shape == r.shape, (o.shape, r.shape)
            np.testing.assert_allclose(np.asarray(o), np.asarray(r),
                                       rtol=5e-2, atol=5e-2)
    print("KERNEL_OK")
</pallas_src>

<mosaic_0001>
module attributes {stable_mosaic.version = 11 : i64} {
  func.func @_conv_gemm_kernel(%arg0: i32, %arg1: memref<128x128xbf16, #tpu.memory_space<vmem>>, %arg2: memref<128x128xbf16, #tpu.memory_space<vmem>>, %arg3: memref<1x128xf32, #tpu.memory_space<vmem>>, %arg4: memref<128x128xf32, #tpu.memory_space<vmem>>) attributes {dimension_semantics = [#tpu.dimension_semantics<parallel>], iteration_bounds = array<i64: 2>, scalar_prefetch = 0 : i64, scratch_operands = 0 : i64, tpu.core_type = #tpu.core_type<tc>, window_params = [{transform_indices = @transform_0, window_bounds = array<i64: 128, 128>}, {pipeline_mode = #tpu.pipeline_mode<synchronous>, transform_indices = @transform_1, window_bounds = array<i64: 128, 128>}, {pipeline_mode = #tpu.pipeline_mode<synchronous>, transform_indices = @transform_2, window_bounds = array<i64: 1, 128>}, {transform_indices = @transform_3, window_bounds = array<i64: 128, 128>}]} {
    %c0 = arith.constant 0 : index
    %c0_0 = arith.constant 0 : index
    %0 = vector.load %arg1[%c0, %c0_0] : memref<128x128xbf16, #tpu.memory_space<vmem>>, vector<128x128xbf16>
    %c0_1 = arith.constant 0 : index
    %c0_2 = arith.constant 0 : index
    %1 = vector.load %arg2[%c0_1, %c0_2] : memref<128x128xbf16, #tpu.memory_space<vmem>>, vector<128x128xbf16>
    %cst = arith.constant dense<0.000000e+00> : vector<128x128xf32>
    %2 = tpu.matmul %0, %1, %cst {dimension_numbers = #tpu.dot_dimension_numbers<[1], [0], [0], [1], [0, 0, 1, 1], [], []>} : vector<128x128xbf16>, vector<128x128xbf16>, vector<128x128xf32> -> vector<128x128xf32>
    %c0_3 = arith.constant 0 : index
    %c0_4 = arith.constant 0 : index
    %3 = vector.load %arg3[%c0_3, %c0_4] : memref<1x128xf32, #tpu.memory_space<vmem>>, vector<1x128xf32>
    %4 = vector.broadcast %3 : vector<1x128xf32> to vector<128x128xf32>
    %5 = arith.addf %2, %4 : vector<128x128xf32>
    %cst_5 = arith.constant 0.000000e+00 : f32
    %6 = vector.broadcast %cst_5 : f32 to vector<128x128xf32>
    %7 = arith.cmpf oge, %5, %6 : vector<128x128xf32>
    %cst_6 = arith.constant 2.000000e-01 : f32
    %8 = vector.broadcast %cst_6 : f32 to vector<128x128xf32>
    %9 = arith.mulf %8, %5 : vector<128x128xf32>
    %10 = arith.select %7, %5, %9 : vector<128x128xi1>, vector<128x128xf32>
    %c0_7 = arith.constant 0 : index
    %c0_8 = arith.constant 0 : index
    %11 = vector.load %arg4[%c0_7, %c0_8] : memref<128x128xf32, #tpu.memory_space<vmem>>, vector<128x128xf32>
    tpu.vector_store %arg4[%c0_7, %c0_8], %10 {strides = array<i32>} : memref<128x128xf32, #tpu.memory_space<vmem>>, vector<128x128xf32>,
    return
  }
  func.func @transform_0(%arg0: i32) -> (i32, i32) {
    %c0_i32 = arith.constant 0 : i32
    %c0_i32_0 = arith.constant 0 : i32
    return %arg0, %c0_i32 : i32, i32
  }
  func.func @transform_1(%arg0: i32) -> (i32, i32) {
    %c0_i32 = arith.constant 0 : i32
    %c0_i32_0 = arith.constant 0 : i32
    %c0_i32_1 = arith.constant 0 : i32
    return %c0_i32, %c0_i32_0 : i32, i32
  }
  func.func @transform_2(%arg0: i32) -> (i32, i32) {
    %c0_i32 = arith.constant 0 : i32
    %c0_i32_0 = arith.constant 0 : i32
    %c0_i32_1 = arith.constant 0 : i32
    return %c0_i32, %c0_i32_0 : i32, i32
  }
  func.func @transform_3(%arg0: i32) -> (i32, i32) {
    %c0_i32 = arith.constant 0 : i32
    %c0_i32_0 = arith.constant 0 : i32
    return %arg0, %c0_i32 : i32, i32
  }
}

</mosaic_0001>

<llo_original>
// kernel: tpu_custom_call.1
$region0: #{tpu_custom_call.1}
  #allocation0 [shape = 'u32[]', space=smem, size = 0x4, offset = 0x4, fixed_abs, tag = 'smem constant byte address 0x4 - core index']
  #allocation1 [shape = 'u32[144,128]{1,0:T(1,128)}', space=vmem, size = 0x12000, scoped, tag = 'internal scratch']
  %s0 = inlined_call_operand.hbm [shape: bf16[256,128], index: 0, kind: input, shape index: {}]
  %s1 = inlined_call_operand.hbm [shape: bf16[128,128], index: 1, kind: input, shape index: {}]
  %s2 = inlined_call_operand.vmem [shape: f32[1,128], index: 2, kind: input, shape index: {}]
  %s3 = inlined_call_operand.hbm [shape: f32[256,128], index: 3, kind: output, shape index: {}]
  %s4 = sld [smem:[#allocation0]]
  $region53: #{tpu_custom_call.1} parent=0
    _
  %s6 = ssub.s32 1, %s4
  %s7 = scalar_select 0, %s6, %s4
  $region1: #{tpu_custom_call.1} parent=0
    #allocation2 [shape = 'u8[65536]{0}', space=vmem, size = 0x10000, scoped, tag = 'input window, operand 0']
    #allocation3 [shape = 's32[2]{0}', space=sflag, size = 0x8, scoped, tag = 'scoped memory for tpu_custom_call.1']
    #allocation4 [shape = 's32[2]{0}', space=sflag, size = 0x8, scoped, tag = 'scoped memory for tpu_custom_call.1']
    #allocation5 [shape = 'u8[32768]{0}', space=vmem, size = 0x8000, scoped, tag = 'input window, operand 1, single buffered']
    #allocation6 [shape = 's32[1]{0}', space=sflag, size = 0x4, scoped, tag = 'scoped memory for tpu_custom_call.1']
    #allocation7 [shape = 'u8[131072]{0}', space=vmem, size = 0x20000, scoped, tag = 'output window, operand 0']
    %8 = vsyncpa [#allocation3], 0
    %s9 = scalar_lea.sflag [#allocation3], 1
    %10 = vsyncpa %s9, 0
    %11 = vsyncpa [#allocation6], 0
    %12 = vsyncpa [#allocation4], 0
    %s13 = scalar_lea.sflag [#allocation4], 1
    %14 = vsyncpa %s13, 0
    loop: start=0, step=1, limit=4
    $region2: #{tpu_custom_call.1} parent=1 // loop_pre_header
      _
    $region3: #{tpu_custom_call.1} parent=1 // loop_header
      %s16 = sphi 0, %s20
      %p17 = scmp.ge.s32.totalorder %s16, 4
      %s26 = sphi 0, %s28
      %s29 = sphi 0, %s26
      %s30 = sphi 0, %s29
      %s46 = sphi 0, %s30
      %s50 = sphi 0, %s50
      %s52 = sphi 0, %s50
      %s53 = sphi 0, %s52
      %s67 = sphi 0, %s53
      %s71 = sphi 0, %s71
      %s73 = sphi 0, %s71
      %s74 = sphi 0, %s73
      %s88 = sphi 0, %s74
      %s94 = sphi 0, %s96
      %s97 = sphi 0, %s94
      %s98 = sphi 0, %s97
      %s114 = sphi 0, %s98
    $region4: #{tpu_custom_call.1} parent=1 // loop_header_branch
      %19 = sbr.rel (%p17) target = $region8
    $region5: #{tpu_custom_call.1} parent=1 // loop_body
      %s21 = ssub.s32 %s16, 1
      %s22 = ssub.s32 %s16, 2
      %s23 = sadd.s32 %s16, 1
      %s24 = ssub.s32 %s16, %s23
      %p25 = scmp.eq.s32.totalorder %s24, 0
      %s27 = sadd.s32 %s26, 1
      %s28 = scalar_select %p25, %s26, %s27
      %p31 = pneg %p25
      %p32 = scmp.eq.s32.totalorder %s16, 1
      %p33 = por %p31, %p32
      %p34 = scmp.ne.s32.totalorder %s26, %s29
      %p35 = scmp.eq.s32.totalorder %s16, 0
      %p36 = por %p34, %p35
      %p37 = scmp.ne.s32.totalorder %s26, %s29
      %p38 = scmp.eq.s32.totalorder %s21, 1
      %p39 = por %p37, %p38
      %p40 = scmp.ne.s32.totalorder %s29, %s30
      %p41 = scmp.eq.s32.totalorder %s21, 0
      %p42 = por %p40, %p41
      %p43 = scmp.ne.s32.totalorder %s29, %s30
      %p44 = scmp.eq.s32.totalorder %s22, 1
      %p45 = por %p43, %p44
      %p47 = scmp.ne.s32.totalorder %s30, %s46
      %p48 = scmp.eq.s32.totalorder %s22, 0
      %p49 = por %p47, %p48
      %s51 = sadd.s32 %s50, 1
      %p54 = scmp.eq.s32.totalorder %s16, 1
      %p55 = scmp.ne.s32.totalorder %s50, %s52
      %p56 = scmp.eq.s32.totalorder %s16, 0
      %p57 = por %p55, %p56
      %p58 = scmp.ne.s32.totalorder %s50, %s52
      %p59 = scmp.eq.s32.totalorder %s21, 1
      %p60 = por %p58, %p59
      %p61 = scmp.ne.s32.totalorder %s52, %s53
      %p62 = scmp.eq.s32.totalorder %s21, 0
      %p63 = por %p61, %p62
      %p64 = scmp.ne.s32.totalorder %s52, %s53
      %p65 = scmp.eq.s32.totalorder %s22, 1
      %p66 = por %p64, %p65
      %p68 = scmp.ne.s32.totalorder %s53, %s67
      %p69 = scmp.eq.s32.totalorder %s22, 0
      %p70 = por %p68, %p69
      %s72 = sadd.s32 %s71, 1
      %p75 = scmp.eq.s32.totalorder %s16, 1
      %p76 = scmp.ne.s32.totalorder %s71, %s73
      %p77 = scmp.eq.s32.totalorder %s16, 0
      %p78 = por %p76, %p77
      %p79 = scmp.ne.s32.totalorder %s71, %s73
      %p80 = scmp.eq.s32.totalorder %s21, 1
      %p81 = por %p79, %p80
      %p82 = scmp.ne.s32.totalorder %s73, %s74
      %p83 = scmp.eq.s32.totalorder %s21, 0
      %p84 = por %p82, %p83
      %p85 = scmp.ne.s32.totalorder %s73, %s74
      %p86 = scmp.eq.s32.totalorder %s22, 1
      %p87 = por %p85, %p86
      %p89 = scmp.ne.s32.totalorder %s74, %s88
      %p90 = scmp.eq.s32.totalorder %s22, 0
      %p91 = por %p89, %p90
      %s92 = ssub.s32 %s16, %s23
      %p93 = scmp.eq.s32.totalorder %s92, 0
      %s95 = sadd.s32 %s94, 1
      %s96 = scalar_select %p93, %s94, %s95
      %p99 = pneg %p93
      %p100 = scmp.eq.s32.totalorder %s16, 1
      %p101 = por %p99, %p100
      %p102 = scmp.ne.s32.totalorder %s94, %s97
      %p103 = scmp.eq.s32.totalorder %s16, 0
      %p104 = por %p102, %p103
      %p105 = scmp.ne.s32.totalorder %s94, %s97
      %p106 = scmp.eq.s32.totalorder %s21, 1
      %p107 = por %p105, %p106
      %p108 = scmp.ne.s32.totalorder %s97, %s98
      %p109 = scmp.eq.s32.totalorder %s21, 0
      %p110 = por %p108, %p109
      %p111 = scmp.ne.s32.totalorder %s97, %s98
      %p112 = scmp.eq.s32.totalorder %s22, 1
      %p113 = por %p111, %p112
      %p115 = scmp.ne.s32.totalorder %s98, %s114
      %p116 = scmp.eq.s32.totalorder %s22, 0
      %p117 = por %p115, %p116
      %p118 = scmp.le.s32.totalorder 1, %s16
      %p119 = scmp.lt.s32.totalorder %s16, 3
      %p120 = pnand %p118, %p119
      %p121 = pneg %p120
      // Predicated region
      $region9: #{tpu_custom_call.1} parent=5 // pred_check
        _
      $region10: #{tpu_custom_call.1} parent=5 // pred_check_branch
        %123 = sbr.rel (%p120) target = $region12
      $region11: #{tpu_custom_call.1} parent=5 // pred_region
        %s124 = ssub.s32 %s16, 1
        // Predicated region
        $region13: #{tpu_custom_call.1} parent=11 // pred_check
          %p125 = pneg %p63
        $region14: #{tpu_custom_call.1} parent=11 // pred_check_branch
          %127 = sbr.rel (%p125) target = $region16
        $region15: #{tpu_custom_call.1} parent=11 // pred_region
          %s129 = ssub.s32 1024, 1024
          %130 = vsyncadd [#allocation6], %s129
          %s131 = sshll.u32 [#allocation5], 4
          %s132 = int_to_ptr.vmem [resolvable:$true] %s131
          %137 = dma.hbm_to_vmem [thread:$0]  %s1, 1024, %s132, [#allocation6], 64, 64, 4
        $region16: #{tpu_custom_call.1} parent=11 // pred_fallthru
          _
        // Predicated region
        $region17: #{tpu_custom_call.1} parent=11 // pred_check
          %p138 = pneg %p84
        $region18: #{tpu_custom_call.1} parent=11 // pred_check_branch
          %140 = sbr.rel (%p138) target = $region20
        $region19: #{tpu_custom_call.1} parent=11 // pred_region
          _
        $region20: #{tpu_custom_call.1} parent=11 // pred_fallthru
          _
      $region12: #{tpu_custom_call.1} parent=5 // pred_fallthru
        _
      %p141 = scmp.lt.s32.totalorder %s16, 2
      // Predicated region
      $region21: #{tpu_custom_call.1} parent=5 // pred_check
        %p142 = pneg %p141
      $region22: #{tpu_custom_call.1} parent=5 // pred_check_branch
        %144 = sbr.rel (%p142) target = $region24
      $region23: #{tpu_custom_call.1} parent=5 // pred_region
        // Predicated region
        $region25: #{tpu_custom_call.1} parent=23 // pred_check
          %p145 = pneg %p36
        $region26: #{tpu_custom_call.1} parent=23 // pred_check_branch
          %147 = sbr.rel (%p145) target = $region28
        $region27: #{tpu_custom_call.1} parent=23 // pred_region
          %s148 = sand.u32 %s26, 1
          %s149 = scalar_lea.sflag [#allocation3], %s148
          %s150 = sand.u32 %s26, 1
          %s151 = smul.addr %s150, 64
          %s152 = scalar_lea.vmem [#allocation2], %s151
          %s153 = smul.u32 16, %s16
          %s155 = ssub.s32 1024, 1024
          %156 = vsyncadd %s149, %s155
          %s157 = smul.addr %s153, 64
          %s158 = scalar_lea.hbm %s0, %s157
          %s159 = sshll.u32 %s152, 4
          %s160 = int_to_ptr.vmem [resolvable:$true] %s159
          %165 = dma.hbm_to_vmem [thread:$0]  %s158, 1024, %s160, %s149, 64, 64, 4
        $region28: #{tpu_custom_call.1} parent=23 // pred_fallthru
          _
      $region24: #{tpu_custom_call.1} parent=5 // pred_fallthru
        _
      %p166 = scmp.le.s32.totalorder 1, %s16
      %p167 = scmp.lt.s32.totalorder %s16, 3
      %p168 = pnand %p166, %p167
      %p169 = pneg %p168
      // Predicated region
      $region29: #{tpu_custom_call.1} parent=5 // pred_check
        _
      $region30: #{tpu_custom_call.1} parent=5 // pred_check_branch
        %171 = sbr.rel (%p168) target = $region32
      $region31: #{tpu_custom_call.1} parent=5 // pred_region
        %s172 = ssub.s32 %s16, 1
        %s173 = sand.u32 %s29, 1
        %s174 = scalar_lea.sflag [#allocation3], %s173
        %s175 = sand.u32 %s29, 1
        %s176 = smul.addr %s175, 64
        %s177 = scalar_lea.vmem [#allocation2], %s176
        // Predicated region
        $region33: #{tpu_custom_call.1} parent=31 // pred_check
          %p178 = pneg %p42
        $region34: #{tpu_custom_call.1} parent=31 // pred_check_branch
          %180 = sbr.rel (%p178) target = $region36
        $region35: #{tpu_custom_call.1} parent=31 // pred_region
          %181 = dma.done %s174, 1024
        $region36: #{tpu_custom_call.1} parent=31 // pred_fallthru
          _
        // Predicated region
        $region37: #{tpu_custom_call.1} parent=31 // pred_check
          %p182 = pneg %p63
        $region38: #{tpu_custom_call.1} parent=31 // pred_check_branch
          %184 = sbr.rel (%p182) target = $region40
        $region39: #{tpu_custom_call.1} parent=31 // pred_region
          %185 = dma.done [#allocation6], 1024
        $region40: #{tpu_custom_call.1} parent=31 // pred_fallthru
          _
        %s186 = sand.u32 %s29, 1
        %s187 = scalar_lea.sflag [#allocation3], %s186
        %s188 = sand.u32 %s29, 1
        %s189 = smul.addr %s188, 64
        %s190 = scalar_lea.vmem [#allocation2], %s189
        %p191 = pneg %p42
        %p192 = pneg %p39
        %p193 = pneg %p63
        %p194 = pneg %p60
        %p195 = pneg %p84
        %p196 = pneg %p81
        %p197 = pneg %p110
        %p198 = pneg %p107
        %s199 = sand.u32 %s97, 1
        %s200 = scalar_lea.sflag [#allocation4], %s199
        %s201 = sand.u32 %s97, 1
        %s202 = smul.addr %s201, 128
        %s203 = scalar_lea.vmem [#allocation7], %s202
        %s204 = smul.u32 16, %s21
        %s205 = smul.u32 16, %s21
        %v207 = vld [vmem:[%s177] sm:$0xf]
        %v208 = vld [vmem:[%s177 + $0x4] sm:$0xf]
        %v209 = vld [vmem:[%s177 + $0x8] sm:$0xf]
        %v210 = vld [vmem:[%s177 + $0xc] sm:$0xf]
        %v211 = vld [vmem:[%s177 + $0x10] sm:$0xf]
        %v212 = vld [vmem:[%s177 + $0x14] sm:$0xf]
        %v213 = vld [vmem:[%s177 + $0x18] sm:$0xf]
        %v214 = vld [vmem:[%s177 + $0x1c] sm:$0xf]
        %v215 = vld [vmem:[%s177 + $0x20] sm:$0xf]
        %v216 = vld [vmem:[%s177 + $0x24] sm:$0xf]
        %v217 = vld [vmem:[%s177 + $0x28] sm:$0xf]
        %v218 = vld [vmem:[%s177 + $0x2c] sm:$0xf]
        %v219 = vld [vmem:[%s177 + $0x30] sm:$0xf]
        %v220 = vld [vmem:[%s177 + $0x34] sm:$0xf]
        %v221 = vld [vmem:[%s177 + $0x38] sm:$0xf]
        %v222 = vld [vmem:[%s177 + $0x3c] sm:$0xf]
        %v223 = vld [vmem:[#allocation5] sm:$0xf]
        %v224 = vld [vmem:[#allocation5 + $0x4] sm:$0xf]
        %v225 = vld [vmem:[#allocation5 + $0x8] sm:$0xf]
        %v226 = vld [vmem:[#allocation5 + $0xc] sm:$0xf]
        %v227 = vld [vmem:[#allocation5 + $0x10] sm:$0xf]
        %v228 = vld [vmem:[#allocation5 + $0x14] sm:$0xf]
        %v229 = vld [vmem:[#allocation5 + $0x18] sm:$0xf]
        %v230 = vld [vmem:[#allocation5 + $0x1c] sm:$0xf]
        %v231 = vld [vmem:[#allocation5 + $0x20] sm:$0xf]
        %v232 = vld [vmem:[#allocation5 + $0x24] sm:$0xf]
        %v233 = vld [vmem:[#allocation5 + $0x28] sm:$0xf]
        %v234 = vld [vmem:[#allocation5 + $0x2c] sm:$0xf]
        %v235 = vld [vmem:[#allocation5 + $0x30] sm:$0xf]
        %v236 = vld [vmem:[#allocation5 + $0x34] sm:$0xf]
        %v237 = vld [vmem:[#allocation5 + $0x38] sm:$0xf]
        %v238 = vld [vmem:[#allocation5 + $0x3c] sm:$0xf]
        %v239 = vld [vmem:[%s2] sm:$0x1]
        %v241 = vlaneseq
        %v242 = vshrl.u32 %v241, 7
        %v243 = vsub.s32 0, %v242
        %v244 = vrot.slane %v239, %v243
        %v262 = vunpack.c.l.b16 %v207
        %v263 = vunpack.c.l.b16 %v208
        %v264 = vunpack.c.l.b16 %v209
        %v265 = vunpack.c.l.b16 %v210
        %v266 = vunpack.c.l.b16 %v211
        %v267 = vunpack.c.l.b16 %v212
        %v268 = vunpack.c.l.b16 %v213
        %v269 = vunpack.c.l.b16 %v214
        %v270 = vunpack.c.l.b16 %v215
        %v271 = vunpack.c.l.b16 %v216
        %v272 = vunpack.c.l.b16 %v217
        %v273 = vunpack.c.l.b16 %v218
        %v274 = vunpack.c.l.b16 %v219
        %v275 = vunpack.c.l.b16 %v220
        %v276 = vunpack.c.l.b16 %v221
        %v277 = vunpack.c.l.b16 %v222
        %v278 = vpack.c.b16 %v263, %v262
        %v279 = vpack.c.b16 %v265, %v264
        %v280 = vpack.c.b16 %v267, %v266
        %v281 = vpack.c.b16 %v269, %v268
        %v282 = vpack.c.b16 %v271, %v270
        %v283 = vpack.c.b16 %v273, %v272
        %v284 = vpack.c.b16 %v275, %v274
        %v285 = vpack.c.b16 %v277, %v276
        %v310 = vunpack.c.l.b16 %v223
        %v311 = vunpack.c.l.b16 %v224
        %v312 = vunpack.c.l.b16 %v225
        %v313 = vunpack.c.l.b16 %v226
        %v314 = vunpack.c.l.b16 %v227
        %v315 = vunpack.c.l.b16 %v228
        %v316 = vunpack.c.l.b16 %v229
        %v317 = vunpack.c.l.b16 %v230
        %v318 = vunpack.c.l.b16 %v231
        %v319 = vunpack.c.l.b16 %v232
        %v320 = vunpack.c.l.b16 %v233
        %v321 = vunpack.c.l.b16 %v234
        %v322 = vunpack.c.l.b16 %v235
        %v323 = vunpack.c.l.b16 %v236
        %v324 = vunpack.c.l.b16 %v237
        %v325 = vunpack.c.l.b16 %v238
        %v326 = vpack.c.b16 %v311, %v310
        %v327 = vpack.c.b16 %v313, %v312
        %v328 = vpack.c.b16 %v315, %v314
        %v329 = vpack.c.b16 %v317, %v316
        %v330 = vpack.c.b16 %v319, %v318
        %v331 = vpack.c.b16 %v321, %v320
        %v332 = vpack.c.b16 %v323, %v322
        %v333 = vpack.c.b16 %v325, %v324
        %342 = vmatprep.subr.bf16.mxu0 0
        %343 = vmatpush1.bf16.msra.mxu0 %v326
        %344 = vmatprep.subr.bf16.mxu0 0
        %345 = vmatpush1.bf16.msra.mxu0 %v327
        %346 = vmatprep.subr.bf16.mxu0 0
        %347 = vmatpush1.bf16.msra.mxu0 %v328
        %348 = vmatprep.subr.bf16.mxu0 0
        %349 = vmatpush1.bf16.msra.mxu0 %v329
        %350 = vmatprep.subr.bf16.mxu0 0
        %351 = vmatpush1.bf16.msra.mxu0 %v330
        %352 = vmatprep.subr.bf16.mxu0 0
        %353 = vmatpush1.bf16.msra.mxu0 %v331
        %354 = vmatprep.subr.bf16.mxu0 0
        %355 = vmatpush1.bf16.msra.mxu0 %v332
        %356 = vmatprep.subr.bf16.mxu0 0
        %357 = vmatpush1.bf16.msra.mxu0 %v333
        %358 = vmatprep.subr.bf16.mxu0 0
        %359 = vmatpush1.bf16.msra.mxu0 0
        %360 = vmatprep.subr.bf16.mxu0 0
        %361 = vmatpush1.bf16.msra.mxu0 0
        %362 = vmatprep.subr.bf16.mxu0 0
        %363 = vmatpush1.bf16.msra.mxu0 0
        %364 = vmatprep.subr.bf16.mxu0 0
        %365 = vmatpush1.bf16.msra.mxu0 0
        %366 = vmatprep.subr.bf16.mxu0 0
        %367 = vmatpush1.bf16.msra.mxu0 0
        %368 = vmatprep.subr.bf16.mxu0 0
        %369 = vmatpush1.bf16.msra.mxu0 0
        %370 = vmatprep.subr.bf16.mxu0 0
        %371 = vmatpush1.bf16.msra.mxu0 0
        %372 = vmatprep.subr.bf16.mxu0 0
        %373 = vmatpush1.bf16.msra.mxu0 0
        %374 = vmatprep.mubr.bf16.mxu0 0
        %375 = vmatmul.mubr.bf16.gmra.mrb[0].mxu0 %v278
        %v376 = vpop.f32.mrb[0].mxu0
        %v377 = vadd.f32 %v244, %v376
        %v378 = vpop.f32.mrb[0].mxu0
        %v379 = vpop.f32.mrb[0].mxu0
        %v380 = vadd.f32 %v244, %v379
        %v381 = vpop.f32.mrb[0].mxu0
        %382 = vmatprep.mubr.bf16.mxu0 0
        %383 = vmatmul.mubr.bf16.gmra.mrb[0].mxu0 %v279
        %v384 = vpop.f32.mrb[0].mxu0
        %v385 = vadd.f32 %v244, %v384
        %v386 = vpop.f32.mrb[0].mxu0
        %v387 = vpop.f32.mrb[0].mxu0
        %v388 = vadd.f32 %v244, %v387
        %v389 = vpop.f32.mrb[0].mxu0
        %390 = vmatprep.mubr.bf16.mxu0 0
        %391 = vmatmul.mubr.bf16.gmra.mrb[0].mxu0 %v280
        %v392 = vpop.f32.mrb[0].mxu0
        %v393 = vadd.f32 %v244, %v392
        %v394 = vpop.f32.mrb[0].mxu0
        %v395 = vpop.f32.mrb[0].mxu0
        %v396 = vadd.f32 %v244, %v395
        %v397 = vpop.f32.mrb[0].mxu0
        %398 = vmatprep.mubr.bf16.mxu0 0
        %399 = vmatmul.mubr.bf16.gmra.mrb[0].mxu0 %v281
        %v400 = vpop.f32.mrb[0].mxu0
        %v401 = vadd.f32 %v244, %v400
        %v402 = vpop.f32.mrb[0].mxu0
        %v403 = vpop.f32.mrb[0].mxu0
        %v404 = vadd.f32 %v244, %v403
        %v405 = vpop.f32.mrb[0].mxu0
        %406 = vmatprep.mubr.bf16.mxu0 0
        %407 = vmatmul.mubr.bf16.gmra.mrb[0].mxu0 %v282
        %v408 = vpop.f32.mrb[0].mxu0
        %v409 = vadd.f32 %v244, %v408
        %v410 = vpop.f32.mrb[0].mxu0
        %v411 = vpop.f32.mrb[0].mxu0
        %v412 = vadd.f32 %v244, %v411
        %v413 = vpop.f32.mrb[0].mxu0
        %414 = vmatprep.mubr.bf16.mxu0 0
        %415 = vmatmul.mubr.bf16.gmra.mrb[0].mxu0 %v283
        %v416 = vpop.f32.mrb[0].mxu0
        %v417 = vadd.f32 %v244, %v416
        %v418 = vpop.f32.mrb[0].mxu0
        %v419 = vpop.f32.mrb[0].mxu0
        %v420 = vadd.f32 %v244, %v419
        %v421 = vpop.f32.mrb[0].mxu0
        %422 = vmatprep.mubr.bf16.mxu0 0
        %423 = vmatmul.mubr.bf16.gmra.mrb[0].mxu0 %v284
        %v424 = vpop.f32.mrb[0].mxu0
        %v425 = vadd.f32 %v244, %v424
        %v426 = vpop.f32.mrb[0].mxu0
        %v427 = vpop.f32.mrb[0].mxu0
        %v428 = vadd.f32 %v244, %v427
        %v429 = vpop.f32.mrb[0].mxu0
        %430 = vmatprep.mubr.bf16.mxu0 0
        %431 = vmatmul.mubr.bf16.gmra.mrb[0].mxu0 %v285
        %v432 = vpop.f32.mrb[0].mxu0
        %v433 = vadd.f32 %v244, %v432
        %v434 = vpop.f32.mrb[0].mxu0
        %v435 = vpop.f32.mrb[0].mxu0
        %v436 = vadd.f32 %v244, %v435
        %v437 = vpop.f32.mrb[0].mxu0
        %438 = vdwg.mxu0
        %vm439 = vcmp.ge.f32.partialorder %v377, 0.0
        %vm440 = vcmp.ge.f32.partialorder %v380, 0.0
        %vm441 = vcmp.ge.f32.partialorder %v385, 0.0
        %vm442 = vcmp.ge.f32.partialorder %v388, 0.0
        %vm443 = vcmp.ge.f32.partialorder %v393, 0.0
        %vm444 = vcmp.ge.f32.partialorder %v396, 0.0
        %vm445 = vcmp.ge.f32.partialorder %v401, 0.0
        %vm446 = vcmp.ge.f32.partialorder %v404, 0.0
        %vm447 = vcmp.ge.f32.partialorder %v409, 0.0
        %vm448 = vcmp.ge.f32.partialorder %v412, 0.0
        %vm449 = vcmp.ge.f32.partialorder %v417, 0.0
        %vm450 = vcmp.ge.f32.partialorder %v420, 0.0
        %vm451 = vcmp.ge.f32.partialorder %v425, 0.0
        %vm452 = vcmp.ge.f32.partialorder %v428, 0.0
        %vm453 = vcmp.ge.f32.partialorder %v433, 0.0
        %vm454 = vcmp.ge.f32.partialorder %v436, 0.0
        %v455 = vmul.f32 %v377, 0.2
        %v456 = vmul.f32 %v380, 0.2
        %v457 = vmul.f32 %v385, 0.2
        %v458 = vmul.f32 %v388, 0.2
        %v459 = vmul.f32 %v393, 0.2
        %v460 = vmul.f32 %v396, 0.2
        %v461 = vmul.f32 %v401, 0.2
        %v462 = vmul.f32 %v404, 0.2
        %v463 = vmul.f32 %v409, 0.2
        %v464 = vmul.f32 %v412, 0.2
        %v465 = vmul.f32 %v417, 0.2
        %v466 = vmul.f32 %v420, 0.2
        %v467 = vmul.f32 %v425, 0.2
        %v468 = vmul.f32 %v428, 0.2
        %v469 = vmul.f32 %v433, 0.2
        %v470 = vmul.f32 %v436, 0.2
        %v471 = vsel %vm439, %v377, %v455
        %v472 = vsel %vm440, %v380, %v456
        %v473 = vsel %vm441, %v385, %v457
        %v474 = vsel %vm442, %v388, %v458
        %v475 = vsel %vm443, %v393, %v459
        %v476 = vsel %vm444, %v396, %v460
        %v477 = vsel %vm445, %v401, %v461
        %v478 = vsel %vm446, %v404, %v462
        %v479 = vsel %vm447, %v409, %v463
        %v480 = vsel %vm448, %v412, %v464
        %v481 = vsel %vm449, %v417, %v465
        %v482 = vsel %vm450, %v420, %v466
        %v483 = vsel %vm451, %v425, %v467
        %v484 = vsel %vm452, %v428, %v468
        %v485 = vsel %vm453, %v433, %v469
        %v486 = vsel %vm454, %v436, %v470
        %487 = vst [vmem:[%s203] sm:$0xff] %v471
        %488 = vst [vmem:[%s203 + $0x8] sm:$0xff] %v472
        %489 = vst [vmem:[%s203 + $0x10] sm:$0xff] %v473
        %490 = vst [vmem:[%s203 + $0x18] sm:$0xff] %v474
        %491 = vst [vmem:[%s203 + $0x20] sm:$0xff] %v475
        %492 = vst [vmem:[%s203 + $0x28] sm:$0xff] %v476
        %493 = vst [vmem:[%s203 + $0x30] sm:$0xff] %v477
        %494 = vst [vmem:[%s203 + $0x38] sm:$0xff] %v478
        %495 = vst [vmem:[%s203 + $0x40] sm:$0xff] %v479
        %496 = vst [vmem:[%s203 + $0x48] sm:$0xff] %v480
        %497 = vst [vmem:[%s203 + $0x50] sm:$0xff] %v481
        %498 = vst [vmem:[%s203 + $0x58] sm:$0xff] %v482
        %499 = vst [vmem:[%s203 + $0x60] sm:$0xff] %v483
        %500 = vst [vmem:[%s203 + $0x68] sm:$0xff] %v484
        %501 = vst [vmem:[%s203 + $0x70] sm:$0xff] %v485
        %502 = vst [vmem:[%s203 + $0x78] sm:$0xff] %v486
        %s503 = sand.u32 %s97, 1
        %s504 = scalar_lea.sflag [#allocation4], %s503
        %s505 = sand.u32 %s97, 1
        %s506 = smul.addr %s505, 128
        %s507 = scalar_lea.vmem [#allocation7], %s506
        // Predicated region
        $region41: #{tpu_custom_call.1} parent=31 // pred_check
          %p508 = pneg %p107
        $region42: #{tpu_custom_call.1} parent=31 // pred_check_branch
          %510 = sbr.rel (%p508) target = $region44
        $region43: #{tpu_custom_call.1} parent=31 // pred_region
          %s511 = smul.u32 16, %s21
          %s513 = ssub.s32 2048, 2048
          %514 = vsyncadd %s504, %s513
          %s515 = smul.addr %s511, 128
          %s516 = scalar_lea.hbm %s3, %s515
          %s517 = sshll.u32 %s507, 4
          %s518 = int_to_ptr.vmem [resolvable:$true] %s517
          %523 = dma.vmem_to_hbm [thread:$0]  %s518, 2048, %s516, %s504, 128, 128, 8
        $region44: #{tpu_custom_call.1} parent=31 // pred_fallthru
          _
      $region32: #{tpu_custom_call.1} parent=5 // pred_fallthru
        _
      %p524 = scmp.le.s32.totalorder 2, %s16
      // Predicated region
      $region45: #{tpu_custom_call.1} parent=5 // pred_check
        %p525 = pneg %p524
      $region46: #{tpu_custom_call.1} parent=5 // pred_check_branch
        %527 = sbr.rel (%p525) target = $region48
      $region47: #{tpu_custom_call.1} parent=5 // pred_region
        %s528 = ssub.s32 %s16, 2
        // Predicated region
        $region49: #{tpu_custom_call.1} parent=47 // pred_check
          %p529 = pneg %p113
        $region50: #{tpu_custom_call.1} parent=47 // pred_check_branch
          %531 = sbr.rel (%p529) target = $region52
        $region51: #{tpu_custom_call.1} parent=47 // pred_region
          %s532 = sand.u32 %s98, 1
          %s533 = scalar_lea.sflag [#allocation4], %s532
          %s534 = sand.u32 %s98, 1
          %s535 = smul.addr %s534, 128
          %s536 = scalar_lea.vmem [#allocation7], %s535
          %537 = dma.done %s533, 2048
        $region52: #{tpu_custom_call.1} parent=47 // pred_fallthru
          _
      $region48: #{tpu_custom_call.1} parent=5 // pred_fallthru
        _
    $region6: #{tpu_custom_call.1} parent=1 // loop_footer
      %s20 = sadd.s32 1, %s16
    $region7: #{tpu_custom_call.1} parent=1 // loop_footer_branch
      %15 = sbr.rel target = $region3
    $region8: #{tpu_custom_call.1} parent=1 // loop_exit
      _
    %538 = vsyncpa [#allocation3], 1
    %s539 = scalar_lea.sflag [#allocation3], 1
    %540 = vsyncpa %s539, 1
    %541 = vsyncpa [#allocation6], 1
    %542 = vsyncpa [#allocation4], 1
    %s543 = scalar_lea.sflag [#allocation4], 1
    %544 = vsyncpa %s543, 1

</llo_original>
